<compile_context>
chip_gen: v6e
topology: v6e:2x2x1
jax: 0.10.0
libtpu: 0.0.40
codegen_flags: <defaults>
</compile_context>

<pallas_src>
import functools

import numpy as np
import jax
import jax.numpy as jnp
from jax.experimental import pallas as pl
from jax.experimental.pallas import tpu as pltpu


# ----------------------------- fused single-pass kernel -----------------------------

def _channel_attention_kernel(x_ref, w_ref, b_ref, out_ref, *, inv_hw):
    """x_ref/out_ref: (bt, c, hw) lane-dense; w_ref: (c_in, c_out); b_ref: (1, c)."""
    x = x_ref[...]                                                    # (bt, c, hw)

    # Global average pool: f32 lane-axis (XLU) sum, scaled by 1/hw in-kernel
    # (precision-safe vs. folding 1/hw into the weights).
    pooled = jnp.sum(x.astype(jnp.float32), axis=2) * inv_hw          # (bt, c)

    # 1x1 conv == channel matmul, vectorized over the whole batch tile.
    y = jnp.dot(pooled, w_ref[...],
                preferred_element_type=jnp.float32) + b_ref[...]      # (bt, c)

    gate = jax.nn.sigmoid(y).astype(x.dtype)                          # (bt, c)  EUP
    out_ref[...] = x * gate[:, :, None]                               # full-width store


# --------------------------- fallback: 3-pass split path ----------------------------

def _gate_scale_kernel(x_ref, g_ref, out_ref):
    """x_ref/out_ref: (1, c, hw_tile); g_ref: (1, c, 1)."""
    out_ref[...] = x_ref[...] * g_ref[...]


def _channel_attention_split(x_flat, w_t, b_row, vmem_limit):
    """Used only when one (c, hw) slab can't be double-buffered in VMEM.
    Costs ~3 HBM passes over x instead of 2."""
    b, c, hw = x_flat.shape
    itemsize = x_flat.dtype.itemsize

    # Gate is tiny (b, c) work: do it in plain JAX.
    pooled = jnp.mean(x_flat.astype(jnp.float32), axis=2)             # (b, c)
    gate = jax.nn.sigmoid(pooled @ w_t + b_row).astype(x_flat.dtype)  # (b, c)
    gate = gate.reshape(b, c, 1)

    # hw tile: largest multiple-of-128 divisor of hw within the per-block budget.
    budget = max(128 * c * itemsize, vmem_limit // 6)
    hw_tile = hw
    t = (budget // max(1, c * itemsize)) // 128 * 128
    t = min(t, hw)
    while t >= 128:
        if hw % t == 0:
            hw_tile = t
            break
        t -= 128

    return pl.pallas_call(
        _gate_scale_kernel,
        out_shape=jax.ShapeDtypeStruct((b, c, hw), x_flat.dtype),
        grid_spec=pltpu.PrefetchScalarGridSpec(
            num_scalar_prefetch=0,
            grid=(b, hw // hw_tile),
            in_specs=[
                pl.BlockSpec((1, c, hw_tile), lambda i, j: (i, 0, j)),
                pl.BlockSpec((1, c, 1), lambda i, j: (i, 0, 0)),
            ],
            out_specs=pl.BlockSpec((1, c, hw_tile), lambda i, j: (i, 0, j)),
        ),
        compiler_params=pltpu.CompilerParams(
            dimension_semantics=("parallel", "parallel"),
            vmem_limit_bytes=vmem_limit),
    )(x_flat, gate)


# ------------------------------------ wrapper ---------------------------------------

def _vmem_budget_bytes():
    """Scoped-VMEM limit: ~3/4 of physical VMEM; conservative fallback (safe on v7x)."""
    phys = None
    try:
        phys = pltpu.get_tpu_info().vmem_capacity_bytes
    except Exception:
        phys = None
    if not phys:
        phys = 64 << 20
    return (int(phys) * 3) // 4


def channel_attention(x_nchw, w_fc, b_fc):
    """Pallas implementation of ChannelAttention.forward.

    x_nchw : (b, c, h, w)
    w_fc   : (c, c)  -- 1x1 Conv2d weight with the trailing (1, 1) squeezed
    b_fc   : (c,)    -- Conv2d bias
    """
    b, c, h, w = x_nchw.shape
    hw = h * w
    dtype = x_nchw.dtype
    itemsize = jnp.dtype(dtype).itemsize

    # NCHW -> (b, c, hw): channels on sublanes, spatial on lanes (free reshape).
    x_flat = x_nchw.reshape(b, c, hw)

    # Pre-transpose weight so the kernel does pooled @ w_t (no in-kernel transpose).
    w_t = jnp.asarray(w_fc, jnp.float32).T                # (c_in, c_out)
    b_row = jnp.asarray(b_fc, jnp.float32).reshape(1, c)  # (1, c)

    vmem_limit = _vmem_budget_bytes()
    per_batch_bytes = c * hw * itemsize

    # If one sample's slab can't be double-buffered (in + out) with headroom,
    # fall back to the 3-pass split path (keeps the kernel usable on v7x's 64 MiB VMEM).
    if 5 * per_batch_bytes > vmem_limit:
        out = _channel_attention_split(x_flat, w_t, b_row, vmem_limit)
        return out.reshape(b, c, h, w)

    # Batch tile: biggest divisor of b whose block stays within a few-MiB budget
    # (double-buffered in + out must fit the scoped limit).
    block_budget = max(per_batch_bytes, min(8 << 20, vmem_limit // 6))
    b_tile = 1
    for t in range(1, b + 1):
        if b % t == 0 and t * per_batch_bytes <= block_budget:
            b_tile = t

    cost = pl.CostEstimate(
        flops=int(2 * b * c * hw + 2 * b * c * c),
        transcendentals=int(b * c),
        bytes_accessed=int(2 * b * c * hw * itemsize + (c * c + c) * 4))

    out = pl.pallas_call(
        functools.partial(_channel_attention_kernel, inv_hw=1.0 / hw),
        out_shape=jax.ShapeDtypeStruct((b, c, hw), dtype),
        grid_spec=pltpu.PrefetchScalarGridSpec(
            num_scalar_prefetch=0,
            grid=(b // b_tile,),
            in_specs=[
                pl.BlockSpec((b_tile, c, hw), lambda i: (i, 0, 0)),   # x slab
                pl.BlockSpec((c, c), lambda i: (0, 0)),               # fc weight (T)
                pl.BlockSpec((1, c), lambda i: (0, 0)),               # fc bias
            ],
            out_specs=pl.BlockSpec((b_tile, c, hw), lambda i: (i, 0, 0)),
        ),
        compiler_params=pltpu.CompilerParams(
            dimension_semantics=("parallel",),       # megacore-shard the batch (v7x)
            vmem_limit_bytes=vmem_limit),
        cost_estimate=cost,
    )(x_flat, w_t, b_row)

    return out.reshape(b, c, h, w)


# ----------------------------------- reference --------------------------------------

def _reference(x, w_fc, b_fc):
    """Pure-JAX reference mirroring the PyTorch forward."""
    pool = x.mean(axis=(2, 3))                        # (b, c)
    y = pool @ w_fc.T + b_fc                          # 1x1 conv with bias
    return x * jax.nn.sigmoid(y)[:, :, None, None]


if __name__ == "__main__":
    batch, channels, height, width = 2, 8, 16, 16

    key = jax.random.PRNGKey(0)
    k1, k2, k3 = jax.random.split(key, 3)
    x = jax.random.normal(k1, (batch, channels, height, width), jnp.float32)
    w_fc = 0.3 * jax.random.normal(k2, (channels, channels), jnp.float32)
    b_fc = 0.1 * jax.random.normal(k3, (channels,), jnp.float32)

    out = channel_attention(x, w_fc, b_fc)
    out = jax.block_until_ready(out)

    ref = _reference(x, w_fc, b_fc)
    np.testing.assert_allclose(np.asarray(out), np.asarray(ref),
                               rtol=1e-5, atol=1e-5)

    print("KERNEL_OK")
</pallas_src>

<mosaic_0001>
module attributes {stable_mosaic.version = 11 : i64} {
  func.func @_channel_attention_kernel(%arg0: i32, %arg1: memref<2x8x256xf32, #tpu.memory_space<vmem>>, %arg2: memref<8x8xf32, #tpu.memory_space<vmem>>, %arg3: memref<1x8xf32, #tpu.memory_space<vmem>>, %arg4: memref<2x8x256xf32, #tpu.memory_space<vmem>>) attributes {dimension_semantics = [#tpu.dimension_semantics<parallel>], iteration_bounds = array<i64: 1>, scalar_prefetch = 0 : i64, scratch_operands = 0 : i64, tpu.core_type = #tpu.core_type<tc>, window_params = [{transform_indices = @transform_0, window_bounds = array<i64: 2, 8, 256>}, {pipeline_mode = #tpu.pipeline_mode<synchronous>, transform_indices = @transform_1, window_bounds = array<i64: 8, 8>}, {pipeline_mode = #tpu.pipeline_mode<synchronous>, transform_indices = @transform_2, window_bounds = array<i64: 1, 8>}, {transform_indices = @transform_3, window_bounds = array<i64: 2, 8, 256>}]} {
    %c0 = arith.constant 0 : index
    %c0_0 = arith.constant 0 : index
    %c0_1 = arith.constant 0 : index
    %0 = vector.load %arg1[%c0, %c0_0, %c0_1] : memref<2x8x256xf32, #tpu.memory_space<vmem>>, vector<2x8x256xf32>
    %cst = arith.constant dense<0.000000e+00> : vector<2x8xf32>
    %1 = vector.multi_reduction <add>, %0, %cst [2] : vector<2x8x256xf32> to vector<2x8xf32>
    %cst_2 = arith.constant 3.906250e-03 : f32
    %2 = vector.broadcast %cst_2 : f32 to vector<2x8xf32>
    %3 = arith.mulf %1, %2 : vector<2x8xf32>
    %c0_3 = arith.constant 0 : index
    %c0_4 = arith.constant 0 : index
    %4 = vector.load %arg2[%c0_3, %c0_4] : memref<8x8xf32, #tpu.memory_space<vmem>>, vector<8x8xf32>
    %cst_5 = arith.constant dense<0.000000e+00> : vector<2x8xf32>
    %5 = tpu.matmul %3, %4, %cst_5 {dimension_numbers = #tpu.dot_dimension_numbers<[1], [0], [0], [1], [0, 0, 1, 1], [], []>} : vector<2x8xf32>, vector<8x8xf32>, vector<2x8xf32> -> vector<2x8xf32>
    %c0_6 = arith.constant 0 : index
    %c0_7 = arith.constant 0 : index
    %6 = vector.load %arg3[%c0_6, %c0_7] : memref<1x8xf32, #tpu.memory_space<vmem>>, vector<1x8xf32>
    %7 = vector.broadcast %6 : vector<1x8xf32> to vector<2x8xf32>
    %8 = arith.addf %5, %7 : vector<2x8xf32>
    %9 = arith.negf %8 : vector<2x8xf32>
    %10 = math.exp %9 : vector<2x8xf32>
    %cst_8 = arith.constant 1.000000e+00 : f32
    %11 = vector.broadcast %cst_8 : f32 to vector<2x8xf32>
    %12 = arith.addf %11, %10 : vector<2x8xf32>
    %13 = arith.divf %11, %12 : vector<2x8xf32>
    %14 = vector.shape_cast %13 : vector<2x8xf32> to vector<2x8x1xf32>
    %15 = vector.broadcast %14 : vector<2x8x1xf32> to vector<2x8x256xf32>
    %16 = arith.mulf %0, %15 : vector<2x8x256xf32>
    %c0_9 = arith.constant 0 : index
    %c0_10 = arith.constant 0 : index
    %c0_11 = arith.constant 0 : index
    %17 = vector.load %arg4[%c0_9, %c0_10, %c0_11] : memref<2x8x256xf32, #tpu.memory_space<vmem>>, vector<2x8x256xf32>
    tpu.vector_store %arg4[%c0_9, %c0_10, %c0_11], %16 {strides = array<i32>} : memref<2x8x256xf32, #tpu.memory_space<vmem>>, vector<2x8x256xf32>,
    return
  }
  func.func @transform_0(%arg0: i32) -> (i32, i32, i32) {
    %c0_i32 = arith.constant 0 : i32
    %c0_i32_0 = arith.constant 0 : i32
    %c0_i32_1 = arith.constant 0 : i32
    return %arg0, %c0_i32, %c0_i32_0 : i32, i32, i32
  }
  func.func @transform_1(%arg0: i32) -> (i32, i32) {
    %c0_i32 = arith.constant 0 : i32
    %c0_i32_0 = arith.constant 0 : i32
    %c0_i32_1 = arith.constant 0 : i32
    return %c0_i32, %c0_i32_0 : i32, i32
  }
  func.func @transform_2(%arg0: i32) -> (i32, i32) {
    %c0_i32 = arith.constant 0 : i32
    %c0_i32_0 = arith.constant 0 : i32
    %c0_i32_1 = arith.constant 0 : i32
    return %c0_i32, %c0_i32_0 : i32, i32
  }
  func.func @transform_3(%arg0: i32) -> (i32, i32, i32) {
    %c0_i32 = arith.constant 0 : i32
    %c0_i32_0 = arith.constant 0 : i32
    %c0_i32_1 = arith.constant 0 : i32
    return %arg0, %c0_i32, %c0_i32_0 : i32, i32, i32
  }
}

</mosaic_0001>

<llo_original>
// kernel: tpu_custom_call.1
$region0: #{tpu_custom_call.1}
  #allocation0 [shape = 'u32[]', space=smem, size = 0x4, offset = 0x4, fixed_abs, tag = 'smem constant byte address 0x4 - core index']
  #allocation1 [shape = 'u32[144,128]{1,0:T(1,128)}', space=vmem, size = 0x12000, scoped, tag = 'internal scratch']
  %s0 = inlined_call_operand.hbm [shape: f32[2,8,256], index: 0, kind: input, shape index: {}]
  %s1 = inlined_call_operand.hbm [shape: f32[8,8], index: 1, kind: input, shape index: {}]
  %s2 = inlined_call_operand.vmem [shape: f32[1,8], index: 2, kind: input, shape index: {}]
  %s3 = inlined_call_operand.hbm [shape: f32[2,8,256], index: 3, kind: output, shape index: {}]
  %s4 = sld [smem:[#allocation0]]
  $region30: #{tpu_custom_call.1} parent=0
    _
  %s6 = ssub.s32 1, %s4
  %s7 = scalar_select 0, %s6, %s4
  $region1: #{tpu_custom_call.1} parent=0
    #allocation2 [shape = 'u8[16384]{0}', space=vmem, size = 0x4000, scoped, tag = 'input window, operand 0, single buffered']
    #allocation3 [shape = 's32[1]{0}', space=sflag, size = 0x4, scoped, tag = 'scoped memory for tpu_custom_call.1']
    #allocation4 [shape = 's32[1]{0}', space=sflag, size = 0x4, scoped, tag = 'scoped memory for tpu_custom_call.1']
    #allocation5 [shape = 'u8[4096]{0}', space=vmem, size = 0x1000, scoped, tag = 'input window, operand 1, single buffered']
    #allocation6 [shape = 's32[1]{0}', space=sflag, size = 0x4, scoped, tag = 'scoped memory for tpu_custom_call.1']
    #allocation7 [shape = 'u8[16384]{0}', space=vmem, size = 0x4000, scoped, tag = 'output window, operand 0, single buffered']
    %8 = vsyncpa [#allocation3], 0
    %9 = vsyncpa [#allocation6], 0
    %10 = vsyncpa [#allocation4], 0
    // Predicated region
    $region2: #{tpu_custom_call.1} parent=1 // pred_check
      _
    $region3: #{tpu_custom_call.1} parent=1 // pred_check_branch
      %12 = sbr.rel (0) target = $region5
    $region4: #{tpu_custom_call.1} parent=1 // pred_region
      %s14 = ssub.s32 512, 512
      %15 = vsyncadd [#allocation3], %s14
      %s16 = sshll.u32 [#allocation2], 4
      %s17 = int_to_ptr.vmem [resolvable:$true] %s16
      %22 = dma.hbm_to_vmem [thread:$0]  %s0, 512, %s17, [#allocation3], 256, 256, 16
    $region5: #{tpu_custom_call.1} parent=1 // pred_fallthru
      _
    // Predicated region
    $region6: #{tpu_custom_call.1} parent=1 // pred_check
      _
    $region7: #{tpu_custom_call.1} parent=1 // pred_check_branch
      %24 = sbr.rel (0) target = $region9
    $region8: #{tpu_custom_call.1} parent=1 // pred_region
      %s26 = ssub.s32 128, 128
      %27 = vsyncadd [#allocation6], %s26
      %s29 = sshll.u32 [#allocation5], 4
      %s30 = int_to_ptr.vmem [resolvable:$true] %s29
      %32 = dma.hbm_to_vmem [thread:$0]  %s1, 128, %s30, [#allocation6]
    $region9: #{tpu_custom_call.1} parent=1 // pred_fallthru
      _
    // Predicated region
    $region10: #{tpu_custom_call.1} parent=1 // pred_check
      _
    $region11: #{tpu_custom_call.1} parent=1 // pred_check_branch
      %34 = sbr.rel (0) target = $region13
    $region12: #{tpu_custom_call.1} parent=1 // pred_region
      _
    $region13: #{tpu_custom_call.1} parent=1 // pred_fallthru
      _
    // Predicated region
    $region14: #{tpu_custom_call.1} parent=1 // pred_check
      _
    $region15: #{tpu_custom_call.1} parent=1 // pred_check_branch
      %36 = sbr.rel (0) target = $region17
    $region16: #{tpu_custom_call.1} parent=1 // pred_region
      %37 = dma.done [#allocation3], 512
    $region17: #{tpu_custom_call.1} parent=1 // pred_fallthru
      _
    // Predicated region
    $region18: #{tpu_custom_call.1} parent=1 // pred_check
      _
    $region19: #{tpu_custom_call.1} parent=1 // pred_check_branch
      %39 = sbr.rel (0) target = $region21
    $region20: #{tpu_custom_call.1} parent=1 // pred_region
      %40 = dma.done [#allocation6], 128
    $region21: #{tpu_custom_call.1} parent=1 // pred_fallthru
      _
    %v41 = vld [vmem:[#allocation2] sm:$0xff]
    %v42 = vld [vmem:[#allocation2 + $0x8] sm:$0xff]
    %v43 = vld [vmem:[#allocation2 + $0x10] sm:$0xff]
    %v44 = vld [vmem:[#allocation2 + $0x18] sm:$0xff]
    %v45 = vadd.f32 %v41, %v42
    %46 = vadd.xlane.f32.xlu0 %v45
    %v47 = vpop.xlane.xlu0 %46
    %v48 = vadd.f32 %v43, %v44
    %49 = vadd.xlane.f32.xlu0 %v48
    %v50 = vpop.xlane.xlu0 %49
    %v51 = vmul.f32 %v47, 0.00390625
    %v52 = vmul.f32 %v50, 0.00390625
    %v53 = vld [vmem:[#allocation5] sm:$0xff]
    %v54 = vld [vmem:[%s2] sm:$0x1]
    %v56 = vlaneseq
    %v57 = vshrl.u32 %v56, 7
    %v58 = vsub.s32 0, %v57
    %v59 = vrot.slane %v54, %v58
    %v63 = vlaneseq
    %v64 = vand.u32 %v63, 127
    %v65 = vlaneseq
    %v66 = vshrl.u32 %v65, 7
    %v67 = vsub.s32 %v64, %v66
    %v68 = vrot.slane %v51, %v67
    %v69 = vlaneseq
    %v70 = vshrl.u32 %v69, 7
    %v71 = vsub.s32 %v64, %v70
    %v72 = vrot.slane %v52, %v71
    %vm73 = vcmask 1041409
    %v74 = vsel %vm73, %v72, %v68
    %vm75 = vcmask 64512
    %v76 = vsel %vm75, %v74, 0
    %78 = vmatprep.subr.mxu0 0.0
    %79 = vmatpush1.msra.mxu0 0.0
    %80 = vmatprep.subr.mxu0 0.0
    %81 = vmatpush1.msra.mxu0 0.0
    %82 = vmatprep.subr.mxu0 0.0
    %83 = vmatpush1.msra.mxu0 0.0
    %84 = vmatprep.subr.mxu0 0.0
    %85 = vmatpush1.msra.mxu0 0.0
    %86 = vmatprep.subr.mxu0 0.0
    %87 = vmatpush1.msra.mxu0 0.0
    %88 = vmatprep.subr.mxu0 0.0
    %89 = vmatpush1.msra.mxu0 0.0
    %90 = vmatprep.subr.mxu0 0.0
    %91 = vmatpush1.msra.mxu0 0.0
    %92 = vmatprep.subr.mxu0 0.0
    %93 = vmatpush1.msra.mxu0 0.0
    %94 = vmatprep.subr.mxu0 0.0
    %95 = vmatpush1.msra.mxu0 0.0
    %96 = vmatprep.subr.mxu0 0.0
    %97 = vmatpush1.msra.mxu0 0.0
    %98 = vmatprep.subr.mxu0 0.0
    %99 = vmatpush1.msra.mxu0 0.0
    %100 = vmatprep.subr.mxu0 0.0
    %101 = vmatpush1.msra.mxu0 0.0
    %102 = vmatprep.subr.mxu0 0.0
    %103 = vmatpush1.msra.mxu0 0.0
    %104 = vmatprep.subr.mxu0 0.0
    %105 = vmatpush1.msra.mxu0 0.0
    %106 = vmatprep.subr.mxu0 0.0
    %107 = vmatpush1.msra.mxu0 0.0
    %108 = vmatprep.subr.mxu0 0.0
    %109 = vmatpush1.msra.mxu0 %v53
    %110 = vmatprep.subr.mxu0 0.0
    %111 = vmatpush2.msra.mxu0 0.0
    %112 = vmatprep.subr.mxu0 0.0
    %113 = vmatpush2.msra.mxu0 0.0
    %114 = vmatprep.subr.mxu0 0.0
    %115 = vmatpush2.msra.mxu0 0.0
    %116 = vmatprep.subr.mxu0 0.0
    %117 = vmatpush2.msra.mxu0 0.0
    %118 = vmatprep.subr.mxu0 0.0
    %119 = vmatpush2.msra.mxu0 0.0
    %120 = vmatprep.subr.mxu0 0.0
    %121 = vmatpush2.msra.mxu0 0.0
    %122 = vmatprep.subr.mxu0 0.0
    %123 = vmatpush2.msra.mxu0 0.0
    %124 = vmatprep.subr.mxu0 0.0
    %125 = vmatpush2.msra.mxu0 0.0
    %126 = vmatprep.subr.mxu0 0.0
    %127 = vmatpush2.msra.mxu0 0.0
    %128 = vmatprep.subr.mxu0 0.0
    %129 = vmatpush2.msra.mxu0 0.0
    %130 = vmatprep.subr.mxu0 0.0
    %131 = vmatpush2.msra.mxu0 0.0
    %132 = vmatprep.subr.mxu0 0.0
    %133 = vmatpush2.msra.mxu0 0.0
    %134 = vmatprep.subr.mxu0 0.0
    %135 = vmatpush2.msra.mxu0 0.0
    %136 = vmatprep.subr.mxu0 0.0
    %137 = vmatpush2.msra.mxu0 0.0
    %138 = vmatprep.subr.mxu0 0.0
    %139 = vmatpush2.msra.mxu0 0.0
    %140 = vmatprep.subr.mxu0 0.0
    %141 = vmatpush2.msra.mxu0 0.0
    %142 = vmatprep.mubr.f32.mxu0 0.0
    %143 = vmatmul.mubr.f32.gmra.mxu0 %v76
    %v144 = vpop.f32.mrf.mxu0
    %v145 = vadd.f32 %v59, %v144
    %v146 = vpop.f32.mrf.mxu0
    %147 = vdwg.mxu0
    %v148 = vxor.u32 %v145, 2147483648
    %v149 = vmul.f32 %v148, 1.442695
    %v150 = vpow.pop %v149
    %v151 = vadd.f32 %v150, 1.0
    %v152 = vrcp.pop %v151
    %v153 = vmul.f32 1.0, %v152
    %v154 = vlaneseq
    %v155 = vshrl.u32 %v154, 7
    %v156 = vsub.s32 0, %v155
    %v157 = vrot.slane %v153, %v156
    %159 = vbcast.lane.b32.xlu0 %v157, 256
    %v160 = vpop.permute.xlu0 %159
    %v161 = vlaneseq
    %v162 = vshrl.u32 %v161, 7
    %v163 = vsub.s32 1, %v162
    %v164 = vrot.slane %v153, %v163
    %166 = vbcast.lane.b32.xlu0 %v164, 256
    %v167 = vpop.permute.xlu0 %166
    %v168 = vmul.f32 %v41, %v160
    %v169 = vmul.f32 %v42, %v160
    %v170 = vmul.f32 %v43, %v167
    %v171 = vmul.f32 %v44, %v167
    %172 = vst [vmem:[#allocation7] sm:$0xff] %v168
    %173 = vst [vmem:[#allocation7 + $0x8] sm:$0xff] %v169
    %174 = vst [vmem:[#allocation7 + $0x10] sm:$0xff] %v170
    %175 = vst [vmem:[#allocation7 + $0x18] sm:$0xff] %v171
    // Predicated region
    $region22: #{tpu_custom_call.1} parent=1 // pred_check
      _
    $region23: #{tpu_custom_call.1} parent=1 // pred_check_branch
      %177 = sbr.rel (0) target = $region25
    $region24: #{tpu_custom_call.1} parent=1 // pred_region
      %s179 = ssub.s32 512, 512
      %180 = vsyncadd [#allocation4], %s179
      %s181 = sshll.u32 [#allocation7], 4
      %s182 = int_to_ptr.vmem [resolvable:$true] %s181
      %187 = dma.vmem_to_hbm [thread:$0]  %s182, 512, %s3, [#allocation4], 256, 256, 16
    $region25: #{tpu_custom_call.1} parent=1 // pred_fallthru
      _
    // Predicated region
    $region26: #{tpu_custom_call.1} parent=1 // pred_check
      _
    $region27: #{tpu_custom_call.1} parent=1 // pred_check_branch
      %189 = sbr.rel (0) target = $region29
    $region28: #{tpu_custom_call.1} parent=1 // pred_region
      %190 = dma.done [#allocation4], 512
    $region29: #{tpu_custom_call.1} parent=1 // pred_fallthru
      _
    %191 = vsyncpa [#allocation3], 1
    %192 = vsyncpa [#allocation6], 1
    %193 = vsyncpa [#allocation4], 1

</llo_original>
